<compile_context>
chip_gen: v7x
topology: tpu7x:2x2x1
jax: 0.10.0
libtpu: 0.0.40
codegen_flags: <defaults>
</compile_context>

<pallas_src>
import functools

import jax
import jax.numpy as jnp
from jax.experimental import pallas as pl
from jax.experimental.pallas import tpu as pltpu

# Max rows per grid step.  16384 rows: x block 1 MiB + out block 2 MiB, double-buffered
# -> ~6 MiB VMEM, comfortably under scoped defaults on v5e/v6e/v7x.
_MAX_TB = 16384


def _round_up(a, m):
    return ((a + m - 1) // m) * m


def gate_kernel(x_ref, w_ref, b_ref, o_ref):
    # x_ref: (TB, 16), w_ref: (16, n), b_ref: (1, n), o_ref: (TB, n)
    x = x_ref[...]
    w = w_ref[...]
    b = b_ref[...]
    # Linear: x @ W^T + b  (W already transposed on the host side), f32 MXU accumulate.
    z = jnp.dot(x, w, preferred_element_type=jnp.float32) + b
    # Numerically stable softmax over dim=1 (last axis of the 2-D logits).
    z = z - jnp.max(z, axis=-1, keepdims=True)
    e = jnp.exp(z)
    denom = jnp.sum(e, axis=-1, keepdims=True)
    # Exact division (kernel is HBM-bound; exact reciprocal costs zero wall-clock and
    # keeps each row summing to 1 exactly).
    o_ref[...] = (e / denom).astype(o_ref.dtype)


def _gate_forward(x, w_t, b2):
    """Pallas implementation of Gate.forward.

    x:   (B, 16) float32
    w_t: (16, n) float32  (PyTorch weight already transposed)
    b2:  (1, n)  float32
    returns (B, 1, n) float32
    """
    B, K = x.shape
    n = w_t.shape[1]

    # Tile selection:
    #   * tiny B: one full-array block (block dim == full dim satisfies the (8,128) rule).
    #   * otherwise: at least two grid steps (v7x megacore split), capped at _MAX_TB,
    #     multiple of 8 sublanes.
    if B <= 8:
        TB = B
    else:
        TB = min(_MAX_TB, _round_up(pl.cdiv(B, 2), 8))
    grid = (pl.cdiv(B, TB),)

    cost = pl.CostEstimate(
        flops=2 * B * K * n,
        transcendentals=B * n,
        bytes_accessed=(B * K + K * n + n + B * n) * 4,
    )

    out2d = pl.pallas_call(
        gate_kernel,
        out_shape=jax.ShapeDtypeStruct((B, n), jnp.float32),
        grid=grid,
        in_specs=[
            pl.BlockSpec((TB, K), lambda i: (i, 0)),   # x: tiled along batch
            pl.BlockSpec((K, n), lambda i: (0, 0)),    # W^T: resident across steps
            pl.BlockSpec((1, n), lambda i: (0, 0)),    # bias: resident across steps
        ],
        out_specs=pl.BlockSpec((TB, n), lambda i: (i, 0)),
        compiler_params=pltpu.CompilerParams(
            dimension_semantics=("parallel",),         # megacore split on v7x
        ),
        cost_estimate=cost,
    )(x, w_t, b2)

    # z.view(-1, 1, n)
    return out2d.reshape(-1, 1, n)


def _gate_xla(x, w_t, b2):
    """Fused XLA path for tiny batches (pallas_call fixed cost dominates there)."""
    n = w_t.shape[1]
    return jax.nn.softmax(x @ w_t + b2, axis=-1).reshape(-1, 1, n)


def make_gate(weight, bias, *, small_b_threshold=2048):
    """Hoist the weight transpose / bias reshape to init time and return a dispatch fn.

    weight: (n, 16) float32 (PyTorch nn.Linear layout), bias: (n,) float32.
    small_b_threshold: below this batch size, use the fused-XLA path instead of Pallas.
    """
    n = weight.shape[0]
    w_t = jnp.asarray(weight).T.astype(jnp.float32)        # (16, n)
    b2 = jnp.asarray(bias).reshape(1, n).astype(jnp.float32)

    pallas_fn = jax.jit(functools.partial(_gate_forward, w_t=w_t, b2=b2))
    xla_fn = jax.jit(functools.partial(_gate_xla, w_t=w_t, b2=b2))

    def gate(x):
        if x.shape[0] < small_b_threshold:
            return xla_fn(x)
        return pallas_fn(x)

    gate.pallas_fn = pallas_fn   # expose the Pallas path directly (used by the demo)
    gate.xla_fn = xla_fn
    return gate


if __name__ == "__main__":
    key = jax.random.PRNGKey(0)
    kx, kw, kb, kx2 = jax.random.split(key, 4)

    IN = 16      # Linear in_features (fixed by the module)
    n = 32       # Gate's n (number of experts)

    # Deterministic synthetic parameters (PyTorch-style shapes: weight (n, 16), bias (n,))
    bound = 1.0 / jnp.sqrt(IN)
    weight = jax.random.uniform(kw, (n, IN), minval=-bound, maxval=bound, dtype=jnp.float32)
    bias = jax.random.uniform(kb, (n,), minval=-bound, maxval=bound, dtype=jnp.float32)

    gate = make_gate(weight, bias)

    ok = True

    # --- Check 1: small batch, force the Pallas kernel path (single full block). ---
    B1 = 8
    x1 = jax.random.normal(kx, (B1, IN), dtype=jnp.float32)
    out1 = jax.block_until_ready(gate.pallas_fn(x1))
    ref1 = jax.nn.softmax(x1 @ weight.T + bias, axis=1).reshape(-1, 1, n)
    ok &= out1.shape == (B1, 1, n)
    ok &= bool(jnp.allclose(out1, ref1, atol=1e-5, rtol=1e-5))

    # --- Check 2: batch not a multiple of the tile -> 2 grid steps + partial last block. ---
    B2 = 200
    x2 = jax.random.normal(kx2, (B2, IN), dtype=jnp.float32)
    out2 = jax.block_until_ready(gate.pallas_fn(x2))
    ref2 = jax.nn.softmax(x2 @ weight.T + bias, axis=1).reshape(-1, 1, n)
    ok &= out2.shape == (B2, 1, n)
    ok &= bool(jnp.allclose(out2, ref2, atol=1e-5, rtol=1e-5))

    # --- Check 3: dispatch wrapper (small-B bypass) stays consistent with the kernel. ---
    out3 = jax.block_until_ready(gate(x1))
    ok &= bool(jnp.allclose(out3, ref1, atol=1e-5, rtol=1e-5))

    assert ok, "mismatch vs reference"
    print("KERNEL_OK")
</pallas_src>

<mosaic_0001>
module attributes {stable_mosaic.version = 11 : i64} {
  func.func @gate_kernel(%arg0: i32, %arg1: memref<8x16xf32, #tpu.memory_space<vmem>>, %arg2: memref<16x32xf32, #tpu.memory_space<vmem>>, %arg3: memref<1x32xf32, #tpu.memory_space<vmem>>, %arg4: memref<8x32xf32, #tpu.memory_space<vmem>>) attributes {dimension_semantics = [#tpu.dimension_semantics<parallel>], iteration_bounds = array<i64: 1>, scalar_prefetch = 0 : i64, scratch_operands = 0 : i64, tpu.core_type = #tpu.core_type<tc>, window_params = [{transform_indices = @transform_0, window_bounds = array<i64: 8, 16>}, {pipeline_mode = #tpu.pipeline_mode<synchronous>, transform_indices = @transform_1, window_bounds = array<i64: 16, 32>}, {pipeline_mode = #tpu.pipeline_mode<synchronous>, transform_indices = @transform_2, window_bounds = array<i64: 1, 32>}, {transform_indices = @transform_3, window_bounds = array<i64: 8, 32>}]} {
    %c0 = arith.constant 0 : index
    %c0_0 = arith.constant 0 : index
    %0 = vector.load %arg1[%c0, %c0_0] : memref<8x16xf32, #tpu.memory_space<vmem>>, vector<8x16xf32>
    %c0_1 = arith.constant 0 : index
    %c0_2 = arith.constant 0 : index
    %1 = vector.load %arg2[%c0_1, %c0_2] : memref<16x32xf32, #tpu.memory_space<vmem>>, vector<16x32xf32>
    %c0_3 = arith.constant 0 : index
    %c0_4 = arith.constant 0 : index
    %2 = vector.load %arg3[%c0_3, %c0_4] : memref<1x32xf32, #tpu.memory_space<vmem>>, vector<1x32xf32>
    %cst = arith.constant dense<0.000000e+00> : vector<8x32xf32>
    %3 = tpu.matmul %0, %1, %cst {dimension_numbers = #tpu.dot_dimension_numbers<[1], [0], [0], [1], [0, 0, 1, 1], [], []>} : vector<8x16xf32>, vector<16x32xf32>, vector<8x32xf32> -> vector<8x32xf32>
    %4 = vector.broadcast %2 : vector<1x32xf32> to vector<8x32xf32>
    %5 = arith.addf %3, %4 : vector<8x32xf32>
    %cst_5 = arith.constant dense<0xFF800000> : vector<8xf32>
    %6 = vector.multi_reduction <maximumf>, %5, %cst_5 [1] : vector<8x32xf32> to vector<8xf32>
    %7 = vector.shape_cast %6 : vector<8xf32> to vector<8x1xf32>
    %8 = vector.broadcast %7 : vector<8x1xf32> to vector<8x32xf32>
    %9 = arith.subf %5, %8 : vector<8x32xf32>
    %10 = math.exp %9 : vector<8x32xf32>
    %cst_6 = arith.constant dense<0.000000e+00> : vector<8xf32>
    %11 = vector.multi_reduction <add>, %10, %cst_6 [1] : vector<8x32xf32> to vector<8xf32>
    %12 = vector.shape_cast %11 : vector<8xf32> to vector<8x1xf32>
    %13 = vector.broadcast %12 : vector<8x1xf32> to vector<8x32xf32>
    %14 = arith.divf %10, %13 : vector<8x32xf32>
    %c0_7 = arith.constant 0 : index
    %c0_8 = arith.constant 0 : index
    %15 = vector.load %arg4[%c0_7, %c0_8] : memref<8x32xf32, #tpu.memory_space<vmem>>, vector<8x32xf32>
    tpu.vector_store %arg4[%c0_7, %c0_8], %14 {strides = array<i32>} : memref<8x32xf32, #tpu.memory_space<vmem>>, vector<8x32xf32>,
    return
  }
  func.func @transform_0(%arg0: i32) -> (i32, i32) {
    %c0_i32 = arith.constant 0 : i32
    %c0_i32_0 = arith.constant 0 : i32
    return %arg0, %c0_i32 : i32, i32
  }
  func.func @transform_1(%arg0: i32) -> (i32, i32) {
    %c0_i32 = arith.constant 0 : i32
    %c0_i32_0 = arith.constant 0 : i32
    %c0_i32_1 = arith.constant 0 : i32
    return %c0_i32, %c0_i32_0 : i32, i32
  }
  func.func @transform_2(%arg0: i32) -> (i32, i32) {
    %c0_i32 = arith.constant 0 : i32
    %c0_i32_0 = arith.constant 0 : i32
    %c0_i32_1 = arith.constant 0 : i32
    return %c0_i32, %c0_i32_0 : i32, i32
  }
  func.func @transform_3(%arg0: i32) -> (i32, i32) {
    %c0_i32 = arith.constant 0 : i32
    %c0_i32_0 = arith.constant 0 : i32
    return %arg0, %c0_i32 : i32, i32
  }
}

</mosaic_0001>

<llo_original>
// kernel: _gate_forward.1
$region0: #{_gate_forward.1}
  #allocation0 [shape = 'u32[]', space=smem, size = 0x4, offset = 0x4, fixed_abs, tag = 'smem constant byte address 0x4 - core index']
  #allocation1 [shape = 'u32[144,128]{1,0:T(1,128)}', space=vmem, size = 0x12000, scoped, tag = 'internal scratch']
  %s0 = inlined_call_operand.hbm [shape: f32[8,16], index: 0, kind: input, shape index: {}]
  %s1 = inlined_call_operand.hbm [shape: f32[16,32], index: 1, kind: input, shape index: {}]
  %s2 = inlined_call_operand.vmem [shape: f32[1,32], index: 2, kind: input, shape index: {}]
  %s3 = inlined_call_operand.hbm [shape: f32[8,32], index: 3, kind: output, shape index: {}]
  %s4 = sld [smem:[#allocation0]]
  $region30: #{_gate_forward.1} parent=0
    _
  %s6 = ssub.s32 1, %s4
  %s7 = scalar_select 0, %s6, %s4
  $region1: #{_gate_forward.1} parent=0
    #allocation2 [shape = 'u8[4096]{0}', space=vmem, size = 0x1000, scoped, tag = 'input window, operand 0, single buffered']
    #allocation3 [shape = 's32[1]{0}', space=sflag, size = 0x4, scoped, tag = 'scoped memory for _gate_forward.1']
    #allocation4 [shape = 's32[1]{0}', space=sflag, size = 0x4, scoped, tag = 'scoped memory for _gate_forward.1']
    #allocation5 [shape = 'u8[8192]{0}', space=vmem, size = 0x2000, scoped, tag = 'input window, operand 1, single buffered']
    #allocation6 [shape = 's32[1]{0}', space=sflag, size = 0x4, scoped, tag = 'scoped memory for _gate_forward.1']
    #allocation7 [shape = 'u8[4096]{0}', space=vmem, size = 0x1000, scoped, tag = 'output window, operand 0, single buffered']
    %8 = vsyncpa [#allocation3], 0
    %9 = vsyncpa [#allocation6], 0
    %10 = vsyncpa [#allocation4], 0
    // Predicated region
    $region2: #{_gate_forward.1} parent=1 // pred_check
      _
    $region3: #{_gate_forward.1} parent=1 // pred_check_branch
      %12 = sbr.rel (0) target = $region5
    $region4: #{_gate_forward.1} parent=1 // pred_region
      %s14 = ssub.s32 128, 128
      %15 = vsyncadd [#allocation3], %s14
      %s17 = sshll.u32 [#allocation2], 4
      %s18 = int_to_ptr.vmem [resolvable:$true] %s17
      %20 = dma.hbm_to_vmem [thread:$0]  %s0, 128, %s18, [#allocation3]
    $region5: #{_gate_forward.1} parent=1 // pred_fallthru
      _
    // Predicated region
    $region6: #{_gate_forward.1} parent=1 // pred_check
      _
    $region7: #{_gate_forward.1} parent=1 // pred_check_branch
      %22 = sbr.rel (0) target = $region9
    $region8: #{_gate_forward.1} parent=1 // pred_region
      %s24 = ssub.s32 256, 256
      %25 = vsyncadd [#allocation6], %s24
      %s26 = sshll.u32 [#allocation5], 4
      %s27 = int_to_ptr.vmem [resolvable:$true] %s26
      %32 = dma.hbm_to_vmem [thread:$0]  %s1, 256, %s27, [#allocation6], 128, 128, 8
    $region9: #{_gate_forward.1} parent=1 // pred_fallthru
      _
    // Predicated region
    $region10: #{_gate_forward.1} parent=1 // pred_check
      _
    $region11: #{_gate_forward.1} parent=1 // pred_check_branch
      %34 = sbr.rel (0) target = $region13
    $region12: #{_gate_forward.1} parent=1 // pred_region
      _
    $region13: #{_gate_forward.1} parent=1 // pred_fallthru
      _
    // Predicated region
    $region14: #{_gate_forward.1} parent=1 // pred_check
      _
    $region15: #{_gate_forward.1} parent=1 // pred_check_branch
      %36 = sbr.rel (0) target = $region17
    $region16: #{_gate_forward.1} parent=1 // pred_region
      %37 = dma.done [#allocation3], 128
    $region17: #{_gate_forward.1} parent=1 // pred_fallthru
      _
    // Predicated region
    $region18: #{_gate_forward.1} parent=1 // pred_check
      _
    $region19: #{_gate_forward.1} parent=1 // pred_check_branch
      %39 = sbr.rel (0) target = $region21
    $region20: #{_gate_forward.1} parent=1 // pred_region
      %40 = dma.done [#allocation6], 256
    $region21: #{_gate_forward.1} parent=1 // pred_fallthru
      _
    %v41 = vld [vmem:[#allocation2] sm:$0xff]
    %v42 = vld [vmem:[#allocation5] sm:$0xff]
    %v43 = vld [vmem:[#allocation5 + $0x8] sm:$0xff]
    %v44 = vld [vmem:[%s2] sm:$0x1]
    %v46 = vlaneseq
    %v47 = vshrl.u32 %v46, 7
    %v48 = vsub.s32 0, %v47
    %v49 = vrot.slane %v44, %v48
    %vm51 = vcmask 130048
    %v53 = vsel %vm51, %v41, 0
    %55 = vmatprep.subr.mxu0 0.0
    %56 = vmatpush1.msra.mxu0 %v42
    %57 = vmatprep.subr.mxu0 0.0
    %58 = vmatpush1.msra.mxu0 %v43
    %59 = vmatprep.subr.mxu0 0.0
    %60 = vmatpush1.msra.mxu0 0.0
    %61 = vmatprep.subr.mxu0 0.0
    %62 = vmatpush1.msra.mxu0 0.0
    %63 = vmatprep.subr.mxu0 0.0
    %64 = vmatpush1.msra.mxu0 0.0
    %65 = vmatprep.subr.mxu0 0.0
    %66 = vmatpush1.msra.mxu0 0.0
    %67 = vmatprep.subr.mxu0 0.0
    %68 = vmatpush1.msra.mxu0 0.0
    %69 = vmatprep.subr.mxu0 0.0
    %70 = vmatpush1.msra.mxu0 0.0
    %71 = vmatprep.subr.mxu0 0.0
    %72 = vmatpush1.msra.mxu0 0.0
    %73 = vmatprep.subr.mxu0 0.0
    %74 = vmatpush1.msra.mxu0 0.0
    %75 = vmatprep.subr.mxu0 0.0
    %76 = vmatpush1.msra.mxu0 0.0
    %77 = vmatprep.subr.mxu0 0.0
    %78 = vmatpush1.msra.mxu0 0.0
    %79 = vmatprep.subr.mxu0 0.0
    %80 = vmatpush1.msra.mxu0 0.0
    %81 = vmatprep.subr.mxu0 0.0
    %82 = vmatpush1.msra.mxu0 0.0
    %83 = vmatprep.subr.mxu0 0.0
    %84 = vmatpush1.msra.mxu0 0.0
    %85 = vmatprep.subr.mxu0 0.0
    %86 = vmatpush1.msra.mxu0 0.0
    %87 = vmatprep.subr.mxu0 0.0
    %88 = vmatpush1.msra.mxu0 0.0
    %89 = vmatprep.subr.mxu0 0.0
    %90 = vmatpush1.msra.mxu0 0.0
    %91 = vmatprep.subr.mxu0 0.0
    %92 = vmatpush1.msra.mxu0 0.0
    %93 = vmatprep.subr.mxu0 0.0
    %94 = vmatpush1.msra.mxu0 0.0
    %95 = vmatprep.subr.mxu0 0.0
    %96 = vmatpush1.msra.mxu0 0.0
    %97 = vmatprep.subr.mxu0 0.0
    %98 = vmatpush1.msra.mxu0 0.0
    %99 = vmatprep.subr.mxu0 0.0
    %100 = vmatpush1.msra.mxu0 0.0
    %101 = vmatprep.subr.mxu0 0.0
    %102 = vmatpush1.msra.mxu0 0.0
    %103 = vmatprep.subr.mxu0 0.0
    %104 = vmatpush1.msra.mxu0 0.0
    %105 = vmatprep.subr.mxu0 0.0
    %106 = vmatpush1.msra.mxu0 0.0
    %107 = vmatprep.subr.mxu0 0.0
    %108 = vmatpush1.msra.mxu0 0.0
    %109 = vmatprep.subr.mxu0 0.0
    %110 = vmatpush1.msra.mxu0 0.0
    %111 = vmatprep.subr.mxu0 0.0
    %112 = vmatpush1.msra.mxu0 0.0
    %113 = vmatprep.subr.mxu0 0.0
    %114 = vmatpush1.msra.mxu0 0.0
    %115 = vmatprep.subr.mxu0 0.0
    %116 = vmatpush1.msra.mxu0 0.0
    %117 = vmatprep.subr.mxu0 0.0
    %118 = vmatpush1.msra.mxu0 0.0
    %119 = vmatprep.mubr.f32.mxu0 0.0
    %120 = vmatmul.mubr.f32.gmra.mrb[0].mxu0 %v53
    %v121 = vpop.f32.mrb[0].mxu0
    %v122 = vadd.f32 %v49, %v121
    %v123 = vpop.f32.mrb[0].mxu0
    %124 = vdwg.mxu0
    %vm125 = vcmask 261120
    %v126 = vsel %vm125, %v122, -inf
    %127 = vmax.xlane.f32.xlu0 %v126
    %v128 = vpop.xlane.xlu0 %127
    %v129 = vsub.f32 %v122, %v128
    %v130 = vmul.f32 %v129, 1.442695
    %v131 = vpow.pop %v130
    %v132 = vsel %vm125, %v131, 0.0
    %133 = vadd.xlane.f32.xlu0 %v132
    %v134 = vpop.xlane.xlu0 %133
    %v135 = vrcp.pop %v134
    %v136 = vmul.f32 %v131, %v135
    %137 = vst.msk [vmem:[#allocation7] sm:$0xff] %vm125, %v136
    // Predicated region
    $region22: #{_gate_forward.1} parent=1 // pred_check
      _
    $region23: #{_gate_forward.1} parent=1 // pred_check_branch
      %139 = sbr.rel (0) target = $region25
    $region24: #{_gate_forward.1} parent=1 // pred_region
      %s141 = ssub.s32 128, 128
      %142 = vsyncadd [#allocation4], %s141
      %s144 = sshll.u32 [#allocation7], 4
      %s145 = int_to_ptr.vmem [resolvable:$true] %s144
      %147 = dma.vmem_to_hbm [thread:$0]  %s145, 128, %s3, [#allocation4]
    $region25: #{_gate_forward.1} parent=1 // pred_fallthru
      _
    // Predicated region
    $region26: #{_gate_forward.1} parent=1 // pred_check
      _
    $region27: #{_gate_forward.1} parent=1 // pred_check_branch
      %149 = sbr.rel (0) target = $region29
    $region28: #{_gate_forward.1} parent=1 // pred_region
      %150 = dma.done [#allocation4], 128
    $region29: #{_gate_forward.1} parent=1 // pred_fallthru
      _
    %151 = vsyncpa [#allocation3], 1
    %152 = vsyncpa [#allocation6], 1
    %153 = vsyncpa [#allocation4], 1

</llo_original>
